<compile_context>
chip_gen: v5e
topology: v5e:2x2
jax: 0.10.0
libtpu: 0.0.40
codegen_flags: <defaults>
</compile_context>

<pallas_src>
import jax
import jax.numpy as jnp
from jax.experimental import pallas as pl
from jax.experimental.pallas import tpu as pltpu


def _round_up(n, m):
    return ((n + m - 1) // m) * m


# ----------------------------------------------------------------------------
# Kernel
# ----------------------------------------------------------------------------
def _dvae_kernel(x_ref, w1_ref, b1_ref, wlat_ref, blat_ref,
                 wdec_ref, bdec_ref, w3_ref, b3_ref,
                 recon_ref, latent_ref):
    mm = w1_ref.dtype
    # x arrives as f32; cast to the matmul dtype here (VPU) instead of in the
    # wrapper, saving a full HBM read+write pass on the input.
    x = x_ref[...].astype(mm)

    # encode: h1 = relu(fc1(x))        (bf16 MXU, f32 accumulate + epilogue)
    h1 = jnp.dot(x, w1_ref[...], preferred_element_type=jnp.float32) + b1_ref[...]
    h1 = jnp.maximum(h1, 0.0)
    h1m = h1.astype(mm)

    # fused mu|logvar head: one lane-dense (mid_pad, lat_pad) matmul;
    # padded lanes carry zero weights/biases and are sliced off in the wrapper.
    lat = jnp.dot(h1m, wlat_ref[...],
                  preferred_element_type=jnp.float32) + blat_ref[...]
    latent_ref[...] = lat.astype(latent_ref.dtype)

    # decode with the eval-mode fold (z == mu):
    #   h3 = relu(h1 @ (Wmu^T @ W2^T) + (bmu @ W2^T + b2))
    h3 = jnp.dot(h1m, wdec_ref[...],
                 preferred_element_type=jnp.float32) + bdec_ref[...]
    h3 = jnp.maximum(h3, 0.0)
    logits = jnp.dot(h3.astype(mm), w3_ref[...],
                     preferred_element_type=jnp.float32) + b3_ref[...]

    # sigmoid via EUP exp + EUP approx reciprocal (keeps the VALU slot free)
    recon = pl.reciprocal(1.0 + jnp.exp(-logits), approx=True)
    recon_ref[...] = recon.astype(recon_ref.dtype)


# ----------------------------------------------------------------------------
# Parameter preparation (one-time, outside the hot path)
# ----------------------------------------------------------------------------
def prepare_params(params, matmul_dtype=jnp.bfloat16):
    """Transpose PyTorch (out, in) weights to (in, out), pack the mu/logvar
    heads, precompute the eval-mode decoder fold, zero-pad feature dims to
    128-lane multiples, cast matmul weights to bf16, keep biases in f32."""
    f32 = jnp.float32
    w1 = params["fc1_w"].astype(f32).T          # (in,  mid)
    b1 = params["fc1_b"].astype(f32)
    wmu_t = params["fcmu_w"].astype(f32).T      # (mid, mu)
    bmu = params["fcmu_b"].astype(f32)
    wvar_t = params["fcvar_w"].astype(f32).T    # (mid, var)
    bvar = params["fcvar_b"].astype(f32)
    w2_t = params["fc2_w"].astype(f32).T        # (mu,  mid)
    b2 = params["fc2_b"].astype(f32)
    w3 = params["fc3_w"].astype(f32).T          # (mid, in)
    b3 = params["fc3_b"].astype(f32)

    input_size, mid_size = w1.shape
    mu_size = wmu_t.shape[1]
    var_size = wvar_t.shape[1]
    lat_size = mu_size + var_size

    # eval-mode fold (z == mu):  h3_pre = h1 @ W_dec + b_dec   (done in f32)
    wdec = wmu_t @ w2_t                         # (mid, mid)
    bdec = bmu @ w2_t + b2                      # (mid,)

    wlat = jnp.concatenate([wmu_t, wvar_t], axis=1)   # (mid, mu+var)
    blat = jnp.concatenate([bmu, bvar])

    mid_pad = _round_up(int(mid_size), 128)
    lat_pad = _round_up(int(lat_size), 128)
    out_pad = _round_up(int(input_size), 128)

    def padw(w, rows, cols):
        return jnp.pad(w, ((0, rows - w.shape[0]),
                           (0, cols - w.shape[1]))).astype(matmul_dtype)

    def padb(b, cols):
        return jnp.pad(b, (0, cols - b.shape[0]))[None, :].astype(f32)

    arrays = (
        padw(w1, int(input_size), mid_pad), padb(b1, mid_pad),
        padw(wlat, mid_pad, lat_pad),       padb(blat, lat_pad),
        padw(wdec, mid_pad, mid_pad),       padb(bdec, mid_pad),
        padw(w3, mid_pad, out_pad),         padb(b3, out_pad),
    )
    return dict(arrays=arrays,
                input_size=int(input_size), mid_pad=mid_pad,
                mu_size=int(mu_size), var_size=int(var_size),
                lat_pad=lat_pad, out_pad=out_pad)


# ----------------------------------------------------------------------------
# Batch-tile selection
# ----------------------------------------------------------------------------
def _pick_batch_tile(B, per_row_bytes, resident_bytes, budget_bytes):
    """Largest batch tile (multiple of 16) that
      (a) leaves >= 2 grid steps so the "parallel" batch axis can shard across
          both TensorCores on v7x,
      (b) fits the double-buffered streamed tiles + resident params +
          intermediates within the VMEM budget,
      (c) prefers tiles that divide B evenly (no padded edge block)."""
    if B < 32:
        return B
    vmem_cap = max((budget_bytes - resident_bytes) // max(per_row_bytes, 1), 16)
    split_cap = _round_up(pl.cdiv(B, 2), 16)
    cap = max(16, min(2048, int(vmem_cap), split_cap))
    cap = (cap // 16) * 16
    for tb in range(cap, 15, -16):
        if B % tb == 0:
            return tb
    return cap


# ----------------------------------------------------------------------------
# Forward wrapper
# ----------------------------------------------------------------------------
def dvae_forward(x, prepared, *, batch_tile=None):
    """Fused DVAE forward (eval mode).

    x: (B, inputSize) float32
    prepared: output of prepare_params()
    returns: (recon (B, in), mu (B, mu), logvar (B, var)) in float32
    """
    arrs = prepared["arrays"]
    input_size = prepared["input_size"]
    mid_pad = prepared["mid_pad"]
    lat_pad = prepared["lat_pad"]
    out_pad = prepared["out_pad"]
    mu_size = prepared["mu_size"]
    var_size = prepared["var_size"]

    B, in_dim = x.shape
    assert in_dim == input_size
    x = x.astype(jnp.float32)           # keep f32; kernel casts on the VPU

    # --- VMEM-aware batch tile ------------------------------------------
    stream_row = 4 * (input_size + out_pad + lat_pad)        # x in + f32 outs
    inter_row = (4 * (2 * mid_pad + lat_pad + out_pad)       # f32 intermediates
                 + 2 * (input_size + 2 * mid_pad))           # bf16 copies
    per_row = 2 * stream_row + inter_row                     # 2x = double-buffer
    resident_bytes = 2 * sum(int(a.size) * a.dtype.itemsize for a in arrs)
    budget = 40 << 20                                        # safe under v7x 64 MiB
    TB = batch_tile if batch_tile is not None else _pick_batch_tile(
        B, per_row, resident_bytes, budget)
    grid = (pl.cdiv(B, TB),)

    vmem_limit = int(min(48 << 20,
                         max(TB * per_row + resident_bytes + (2 << 20),
                             32 << 20)))

    out_shapes = (jax.ShapeDtypeStruct((B, out_pad), jnp.float32),
                  jax.ShapeDtypeStruct((B, lat_pad), jnp.float32))
    out_specs = (pl.BlockSpec((TB, out_pad), lambda i: (i, 0)),   # recon tile
                 pl.BlockSpec((TB, lat_pad), lambda i: (i, 0)))   # mu|logvar

    flops = 2 * B * (input_size * mid_pad + mid_pad * lat_pad
                     + mid_pad * mid_pad + mid_pad * out_pad)
    bytes_accessed = (B * input_size * 4 + resident_bytes // 2
                      + B * out_pad * 4 + B * lat_pad * 4)
    cost = pl.CostEstimate(flops=flops, transcendentals=B * out_pad,
                           bytes_accessed=bytes_accessed)

    def call(single_buffer_params):
        def resident(a):
            # weights/biases: same block every grid step -> stay VMEM-resident
            if single_buffer_params:
                return pl.BlockSpec(a.shape, lambda i: (0, 0),
                                    pipeline_mode=pl.Buffered(1))
            return pl.BlockSpec(a.shape, lambda i: (0, 0))

        in_specs = [pl.BlockSpec((TB, input_size), lambda i: (i, 0))]  # x tile
        in_specs += [resident(a) for a in arrs]
        return pl.pallas_call(
            _dvae_kernel,
            out_shape=out_shapes,
            grid=grid,
            in_specs=in_specs,
            out_specs=out_specs,
            compiler_params=pltpu.CompilerParams(
                dimension_semantics=("parallel",),
                vmem_limit_bytes=vmem_limit),
            cost_estimate=cost,
        )(x, *arrs)

    try:
        recon_p, latent_p = call(True)
    except Exception:
        # pipeline_mode=pl.Buffered(1) not supported on this jax/libtpu;
        # fall back to default (double-buffered) resident-parameter specs.
        recon_p, latent_p = call(False)

    recon = recon_p[:, :input_size] if out_pad != input_size else recon_p
    mu = latent_p[:, :mu_size]
    logvar = latent_p[:, mu_size:mu_size + var_size]
    return recon, mu, logvar


# ----------------------------------------------------------------------------
# Init + pure-JAX reference
# ----------------------------------------------------------------------------
def init_params(key, input_size, mid_size, mu_size, var_size):
    """Deterministic init mimicking PyTorch nn.Linear default
    (uniform(-1/sqrt(fan_in), 1/sqrt(fan_in)) for weight and bias)."""
    def linear(k, out_f, in_f):
        kw, kb = jax.random.split(k)
        bound = 1.0 / jnp.sqrt(in_f)
        w = jax.random.uniform(kw, (out_f, in_f), jnp.float32, -bound, bound)
        b = jax.random.uniform(kb, (out_f,), jnp.float32, -bound, bound)
        return w, b

    k1, k2, k3, k4, k5 = jax.random.split(key, 5)
    fc1_w, fc1_b = linear(k1, mid_size, input_size)
    fcmu_w, fcmu_b = linear(k2, mu_size, mid_size)
    fcvar_w, fcvar_b = linear(k3, var_size, mid_size)
    fc2_w, fc2_b = linear(k4, mid_size, mu_size)
    fc3_w, fc3_b = linear(k5, input_size, mid_size)
    return dict(fc1_w=fc1_w, fc1_b=fc1_b,
                fcmu_w=fcmu_w, fcmu_b=fcmu_b,
                fcvar_w=fcvar_w, fcvar_b=fcvar_b,
                fc2_w=fc2_w, fc2_b=fc2_b,
                fc3_w=fc3_w, fc3_b=fc3_b)


def _reference_forward(x, p, matmul_dtype=jnp.float32):
    """Pure-JAX reference of the PyTorch forward (eval mode), with the same
    bf16 cast on matmul operands as the kernel (accumulation in f32)."""
    def dot(a, w_pt):  # w_pt is PyTorch (out, in)
        return jnp.dot(a.astype(matmul_dtype), w_pt.T.astype(matmul_dtype),
                       preferred_element_type=jnp.float32)

    h1 = jnp.maximum(dot(x, p["fc1_w"]) + p["fc1_b"], 0.0)
    mu = dot(h1, p["fcmu_w"]) + p["fcmu_b"]
    logvar = dot(h1, p["fcvar_w"]) + p["fcvar_b"]
    z = mu
    h3 = jnp.maximum(dot(z, p["fc2_w"]) + p["fc2_b"], 0.0)
    recon = jax.nn.sigmoid(dot(h3, p["fc3_w"]) + p["fc3_b"])
    return recon, mu, logvar


if __name__ == "__main__":
    # Small shapes consistent with DVarAutoEncoder(inputSize, midSize, muSize, varSize)
    batch = 8
    input_size, mid_size, mu_size, var_size = 32, 64, 16, 16

    key = jax.random.PRNGKey(0)
    kx, kp = jax.random.split(key)
    x = jax.random.normal(kx, (batch, input_size), jnp.float32)
    params = init_params(kp, input_size, mid_size, mu_size, var_size)

    prepared = prepare_params(params, matmul_dtype=jnp.bfloat16)
    recon, mu, logvar = dvae_forward(x, prepared)
    jax.block_until_ready((recon, mu, logvar))

    # Correctness check vs pure-JAX reference with matching bf16 matmul inputs
    r_ref, mu_ref, lv_ref = _reference_forward(x, params, matmul_dtype=jnp.bfloat16)
    assert recon.shape == (batch, input_size)
    assert mu.shape == (batch, mu_size) and logvar.shape == (batch, var_size)
    assert jnp.allclose(recon, r_ref, atol=3e-2, rtol=3e-2), "recon mismatch"
    assert jnp.allclose(mu, mu_ref, atol=3e-2, rtol=3e-2), "mu mismatch"
    assert jnp.allclose(logvar, lv_ref, atol=3e-2, rtol=3e-2), "logvar mismatch"

    print("KERNEL_OK")
</pallas_src>

<mosaic_0001>
module attributes {stable_mosaic.version = 11 : i64} {
  func.func @_dvae_kernel(%arg0: i32, %arg1: memref<8x32xf32, #tpu.memory_space<vmem>>, %arg2: memref<32x128xbf16, #tpu.memory_space<vmem>>, %arg3: memref<1x128xf32, #tpu.memory_space<vmem>>, %arg4: memref<128x128xbf16, #tpu.memory_space<vmem>>, %arg5: memref<1x128xf32, #tpu.memory_space<vmem>>, %arg6: memref<128x128xbf16, #tpu.memory_space<vmem>>, %arg7: memref<1x128xf32, #tpu.memory_space<vmem>>, %arg8: memref<128x128xbf16, #tpu.memory_space<vmem>>, %arg9: memref<1x128xf32, #tpu.memory_space<vmem>>, %arg10: memref<8x128xf32, #tpu.memory_space<vmem>>, %arg11: memref<8x128xf32, #tpu.memory_space<vmem>>) attributes {dimension_semantics = [#tpu.dimension_semantics<parallel>], iteration_bounds = array<i64: 1>, scalar_prefetch = 0 : i64, scratch_operands = 0 : i64, tpu.core_type = #tpu.core_type<tc>, window_params = [{transform_indices = @transform_0, window_bounds = array<i64: 8, 32>}, {pipeline_mode = #tpu.pipeline_mode<synchronous>, transform_indices = @transform_1, window_bounds = array<i64: 32, 128>}, {pipeline_mode = #tpu.pipeline_mode<synchronous>, transform_indices = @transform_2, window_bounds = array<i64: 1, 128>}, {pipeline_mode = #tpu.pipeline_mode<synchronous>, transform_indices = @transform_3, window_bounds = array<i64: 128, 128>}, {pipeline_mode = #tpu.pipeline_mode<synchronous>, transform_indices = @transform_4, window_bounds = array<i64: 1, 128>}, {pipeline_mode = #tpu.pipeline_mode<synchronous>, transform_indices = @transform_5, window_bounds = array<i64: 128, 128>}, {pipeline_mode = #tpu.pipeline_mode<synchronous>, transform_indices = @transform_6, window_bounds = array<i64: 1, 128>}, {pipeline_mode = #tpu.pipeline_mode<synchronous>, transform_indices = @transform_7, window_bounds = array<i64: 128, 128>}, {pipeline_mode = #tpu.pipeline_mode<synchronous>, transform_indices = @transform_8, window_bounds = array<i64: 1, 128>}, {transform_indices = @transform_9, window_bounds = array<i64: 8, 128>}, {transform_indices = @transform_10, window_bounds = array<i64: 8, 128>}]} {
    %c0 = arith.constant 0 : index
    %c0_0 = arith.constant 0 : index
    %0 = vector.load %arg1[%c0, %c0_0] : memref<8x32xf32, #tpu.memory_space<vmem>>, vector<8x32xf32>
    %1 = arith.truncf %0 : vector<8x32xf32> to vector<8x32xbf16>
    %c0_1 = arith.constant 0 : index
    %c0_2 = arith.constant 0 : index
    %2 = vector.load %arg2[%c0_1, %c0_2] : memref<32x128xbf16, #tpu.memory_space<vmem>>, vector<32x128xbf16>
    %cst = arith.constant dense<0.000000e+00> : vector<8x128xf32>
    %3 = tpu.matmul %1, %2, %cst {dimension_numbers = #tpu.dot_dimension_numbers<[1], [0], [0], [1], [0, 0, 1, 1], [], []>} : vector<8x32xbf16>, vector<32x128xbf16>, vector<8x128xf32> -> vector<8x128xf32>
    %c0_3 = arith.constant 0 : index
    %c0_4 = arith.constant 0 : index
    %4 = vector.load %arg3[%c0_3, %c0_4] : memref<1x128xf32, #tpu.memory_space<vmem>>, vector<1x128xf32>
    %5 = vector.broadcast %4 : vector<1x128xf32> to vector<8x128xf32>
    %6 = arith.addf %3, %5 : vector<8x128xf32>
    %cst_5 = arith.constant 0.000000e+00 : f32
    %7 = vector.broadcast %cst_5 : f32 to vector<8x128xf32>
    %8 = arith.maximumf %6, %7 : vector<8x128xf32>
    %9 = arith.truncf %8 : vector<8x128xf32> to vector<8x128xbf16>
    %c0_6 = arith.constant 0 : index
    %c0_7 = arith.constant 0 : index
    %10 = vector.load %arg4[%c0_6, %c0_7] : memref<128x128xbf16, #tpu.memory_space<vmem>>, vector<128x128xbf16>
    %cst_8 = arith.constant dense<0.000000e+00> : vector<8x128xf32>
    %11 = tpu.matmul %9, %10, %cst_8 {dimension_numbers = #tpu.dot_dimension_numbers<[1], [0], [0], [1], [0, 0, 1, 1], [], []>} : vector<8x128xbf16>, vector<128x128xbf16>, vector<8x128xf32> -> vector<8x128xf32>
    %c0_9 = arith.constant 0 : index
    %c0_10 = arith.constant 0 : index
    %12 = vector.load %arg5[%c0_9, %c0_10] : memref<1x128xf32, #tpu.memory_space<vmem>>, vector<1x128xf32>
    %13 = vector.broadcast %12 : vector<1x128xf32> to vector<8x128xf32>
    %14 = arith.addf %11, %13 : vector<8x128xf32>
    %c0_11 = arith.constant 0 : index
    %c0_12 = arith.constant 0 : index
    %15 = vector.load %arg11[%c0_11, %c0_12] : memref<8x128xf32, #tpu.memory_space<vmem>>, vector<8x128xf32>
    tpu.vector_store %arg11[%c0_11, %c0_12], %14 {strides = array<i32>} : memref<8x128xf32, #tpu.memory_space<vmem>>, vector<8x128xf32>,
    %c0_13 = arith.constant 0 : index
    %c0_14 = arith.constant 0 : index
    %16 = vector.load %arg6[%c0_13, %c0_14] : memref<128x128xbf16, #tpu.memory_space<vmem>>, vector<128x128xbf16>
    %cst_15 = arith.constant dense<0.000000e+00> : vector<8x128xf32>
    %17 = tpu.matmul %9, %16, %cst_15 {dimension_numbers = #tpu.dot_dimension_numbers<[1], [0], [0], [1], [0, 0, 1, 1], [], []>} : vector<8x128xbf16>, vector<128x128xbf16>, vector<8x128xf32> -> vector<8x128xf32>
    %c0_16 = arith.constant 0 : index
    %c0_17 = arith.constant 0 : index
    %18 = vector.load %arg7[%c0_16, %c0_17] : memref<1x128xf32, #tpu.memory_space<vmem>>, vector<1x128xf32>
    %19 = vector.broadcast %18 : vector<1x128xf32> to vector<8x128xf32>
    %20 = arith.addf %17, %19 : vector<8x128xf32>
    %cst_18 = arith.constant 0.000000e+00 : f32
    %21 = vector.broadcast %cst_18 : f32 to vector<8x128xf32>
    %22 = arith.maximumf %20, %21 : vector<8x128xf32>
    %23 = arith.truncf %22 : vector<8x128xf32> to vector<8x128xbf16>
    %c0_19 = arith.constant 0 : index
    %c0_20 = arith.constant 0 : index
    %24 = vector.load %arg8[%c0_19, %c0_20] : memref<128x128xbf16, #tpu.memory_space<vmem>>, vector<128x128xbf16>
    %cst_21 = arith.constant dense<0.000000e+00> : vector<8x128xf32>
    %25 = tpu.matmul %23, %24, %cst_21 {dimension_numbers = #tpu.dot_dimension_numbers<[1], [0], [0], [1], [0, 0, 1, 1], [], []>} : vector<8x128xbf16>, vector<128x128xbf16>, vector<8x128xf32> -> vector<8x128xf32>
    %c0_22 = arith.constant 0 : index
    %c0_23 = arith.constant 0 : index
    %26 = vector.load %arg9[%c0_22, %c0_23] : memref<1x128xf32, #tpu.memory_space<vmem>>, vector<1x128xf32>
    %27 = vector.broadcast %26 : vector<1x128xf32> to vector<8x128xf32>
    %28 = arith.addf %25, %27 : vector<8x128xf32>
    %cst_24 = arith.constant 0.000000e+00 : f32
    %29 = vector.broadcast %cst_24 : f32 to vector<8x128xf32>
    %30 = arith.subf %29, %28 : vector<8x128xf32>
    %31 = math.exp %30 : vector<8x128xf32>
    %cst_25 = arith.constant 1.000000e+00 : f32
    %32 = vector.broadcast %cst_25 : f32 to vector<8x128xf32>
    %33 = arith.addf %32, %31 : vector<8x128xf32>
    %34 = tpu.reciprocal %33 {approx = true} : vector<8x128xf32> -> vector<8x128xf32>
    %c0_26 = arith.constant 0 : index
    %c0_27 = arith.constant 0 : index
    %35 = vector.load %arg10[%c0_26, %c0_27] : memref<8x128xf32, #tpu.memory_space<vmem>>, vector<8x128xf32>
    tpu.vector_store %arg10[%c0_26, %c0_27], %34 {strides = array<i32>} : memref<8x128xf32, #tpu.memory_space<vmem>>, vector<8x128xf32>,
    return
  }
  func.func @transform_0(%arg0: i32) -> (i32, i32) {
    %c0_i32 = arith.constant 0 : i32
    %c0_i32_0 = arith.constant 0 : i32
    return %arg0, %c0_i32 : i32, i32
  }
  func.func @transform_1(%arg0: i32) -> (i32, i32) {
    %c0_i32 = arith.constant 0 : i32
    %c0_i32_0 = arith.constant 0 : i32
    %c0_i32_1 = arith.constant 0 : i32
    return %c0_i32, %c0_i32_0 : i32, i32
  }
  func.func @transform_2(%arg0: i32) -> (i32, i32) {
    %c0_i32 = arith.constant 0 : i32
    %c0_i32_0 = arith.constant 0 : i32
    %c0_i32_1 = arith.constant 0 : i32
    return %c0_i32, %c0_i32_0 : i32, i32
  }
  func.func @transform_3(%arg0: i32) -> (i32, i32) {
    %c0_i32 = arith.constant 0 : i32
    %c0_i32_0 = arith.constant 0 : i32
    %c0_i32_1 = arith.constant 0 : i32
    return %c0_i32, %c0_i32_0 : i32, i32
  }
  func.func @transform_4(%arg0: i32) -> (i32, i32) {
    %c0_i32 = arith.constant 0 : i32
    %c0_i32_0 = arith.constant 0 : i32
    %c0_i32_1 = arith.constant 0 : i32
    return %c0_i32, %c0_i32_0 : i32, i32
  }
  func.func @transform_5(%arg0: i32) -> (i32, i32) {
    %c0_i32 = arith.constant 0 : i32
    %c0_i32_0 = arith.constant 0 : i32
    %c0_i32_1 = arith.constant 0 : i32
    return %c0_i32, %c0_i32_0 : i32, i32
  }
  func.func @transform_6(%arg0: i32) -> (i32, i32) {
    %c0_i32 = arith.constant 0 : i32
    %c0_i32_0 = arith.constant 0 : i32
    %c0_i32_1 = arith.constant 0 : i32
    return %c0_i32, %c0_i32_0 : i32, i32
  }
  func.func @transform_7(%arg0: i32) -> (i32, i32) {
    %c0_i32 = arith.constant 0 : i32
    %c0_i32_0 = arith.constant 0 : i32
    %c0_i32_1 = arith.constant 0 : i32
    return %c0_i32, %c0_i32_0 : i32, i32
  }
  func.func @transform_8(%arg0: i32) -> (i32, i32) {
    %c0_i32 = arith.constant 0 : i32
    %c0_i32_0 = arith.constant 0 : i32
    %c0_i32_1 = arith.constant 0 : i32
    return %c0_i32, %c0_i32_0 : i32, i32
  }
  func.func @transform_9(%arg0: i32) -> (i32, i32) {
    %c0_i32 = arith.constant 0 : i32
    %c0_i32_0 = arith.constant 0 : i32
    return %arg0, %c0_i32 : i32, i32
  }
  func.func @transform_10(%arg0: i32) -> (i32, i32) {
    %c0_i32 = arith.constant 0 : i32
    %c0_i32_0 = arith.constant 0 : i32
    return %arg0, %c0_i32 : i32, i32
  }
}

module attributes {stable_mosaic.version = 11 : i64} {
  func.func @_dvae_kernel(%arg0: i32, %arg1: memref<8x32xf32, #tpu.memory_space<vmem>>, %arg2: memref<32x128xbf16, #tpu.memory_space<vmem>>, %arg3: memref<1x128xf32, #tpu.memory_space<vmem>>, %arg4: memref<128x128xbf16, #tpu.memory_space<vmem>>, %arg5: memref<1x128xf32, #tpu.memory_space<vmem>>, %arg6: memref<128x128xbf16, #tpu.memory_space<vmem>>, %arg7: memref<1x128xf32, #tpu.memory_space<vmem>>, %arg8: memref<128x128xbf16, #tpu.memory_space<vmem>>, %arg9: memref<1x128xf32, #tpu.memory_space<vmem>>, %arg10: memref<8x128xf32, #tpu.memory_space<vmem>>, %arg11: memref<8x128xf32, #tpu.memory_space<vmem>>) attributes {dimension_semantics = [#tpu.dimension_semantics<parallel>], iteration_bounds = array<i64: 1>, scalar_prefetch = 0 : i64, scratch_operands = 0 : i64, tpu.core_type = #tpu.core_type<tc>, window_params = [{transform_indices = @transform_0, window_bounds = array<i64: 8, 32>}, {pipeline_mode = #tpu.pipeline_mode<synchronous>, transform_indices = @transform_1, window_bounds = array<i64: 32, 128>}, {pipeline_mode = #tpu.pipeline_mode<synchronous>, transform_indices = @transform_2, window_bounds = array<i64: 1, 128>}, {pipeline_mode = #tpu.pipeline_mode<synchronous>, transform_indices = @transform_3, window_bounds = array<i64: 128, 128>}, {pipeline_mode = #tpu.pipeline_mode<synchronous>, transform_indices = @transform_4, window_bounds = array<i64: 1, 128>}, {pipeline_mode = #tpu.pipeline_mode<synchronous>, transform_indices = @transform_5, window_bounds = array<i64: 128, 128>}, {pipeline_mode = #tpu.pipeline_mode<synchronous>, transform_indices = @transform_6, window_bounds = array<i64: 1, 128>}, {pipeline_mode = #tpu.pipeline_mode<synchronous>, transform_indices = @transform_7, window_bounds = array<i64: 128, 128>}, {pipeline_mode = #tpu.pipeline_mode<synchronous>, transform_indices = @transform_8, window_bounds = array<i64: 1, 128>}, {transform_indices = @transform_9, window_bounds = array<i64: 8, 128>}, {transform_indices = @transform_10, window_bounds = array<i64: 8, 128>}]} {
    %c0 = arith.constant 0 : index
    %c0_0 = arith.constant 0 : index
    %0 = vector.load %arg1[%c0, %c0_0] : memref<8x32xf32, #tpu.memory_space<vmem>>, vector<8x32xf32>
    %1 = arith.truncf %0 : vector<8x32xf32> to vector<8x32xbf16>
    %c0_1 = arith.constant 0 : index
    %c0_2 = arith.constant 0 : index
    %2 = vector.load %arg2[%c0_1, %c0_2] : memref<32x128xbf16, #tpu.memory_space<vmem>>, vector<32x128xbf16>
    %cst = arith.constant dense<0.000000e+00> : vector<8x128xf32>
    %3 = tpu.matmul %1, %2, %cst {dimension_numbers = #tpu.dot_dimension_numbers<[1], [0], [0], [1], [0, 0, 1, 1], [], []>} : vector<8x32xbf16>, vector<32x128xbf16>, vector<8x128xf32> -> vector<8x128xf32>
    %c0_3 = arith.constant 0 : index
    %c0_4 = arith.constant 0 : index
    %4 = vector.load %arg3[%c0_3, %c0_4] : memref<1x128xf32, #tpu.memory_space<vmem>>, vector<1x128xf32>
    %5 = vector.broadcast %4 : vector<1x128xf32> to vector<8x128xf32>
    %6 = arith.addf %3, %5 : vector<8x128xf32>
    %cst_5 = arith.constant 0.000000e+00 : f32
    %7 = vector.broadcast %cst_5 : f32 to vector<8x128xf32>
    %8 = arith.maximumf %6, %7 : vector<8x128xf32>
    %9 = arith.truncf %8 : vector<8x128xf32> to vector<8x128xbf16>
    %c0_6 = arith.constant 0 : index
    %c0_7 = arith.constant 0 : index
    %10 = vector.load %arg4[%c0_6, %c0_7] : memref<128x128xbf16, #tpu.memory_space<vmem>>, vector<128x128xbf16>
    %cst_8 = arith.constant dense<0.000000e+00> : vector<8x128xf32>
    %11 = tpu.matmul %9, %10, %cst_8 {dimension_numbers = #tpu.dot_dimension_numbers<[1], [0], [0], [1], [0, 0, 1, 1], [], []>} : vector<8x128xbf16>, vector<128x128xbf16>, vector<8x128xf32> -> vector<8x128xf32>
    %c0_9 = arith.constant 0 : index
    %c0_10 = arith.constant 0 : index
    %12 = vector.load %arg5[%c0_9, %c0_10] : memref<1x128xf32, #tpu.memory_space<vmem>>, vector<1x128xf32>
    %13 = vector.broadcast %12 : vector<1x128xf32> to vector<8x128xf32>
    %14 = arith.addf %11, %13 : vector<8x128xf32>
    %c0_11 = arith.constant 0 : index
    %c0_12 = arith.constant 0 : index
    %15 = vector.load %arg11[%c0_11, %c0_12] : memref<8x128xf32, #tpu.memory_space<vmem>>, vector<8x128xf32>
    tpu.vector_store %arg11[%c0_11, %c0_12], %14 {strides = array<i32>} : memref<8x128xf32, #tpu.memory_space<vmem>>, vector<8x128xf32>,
    %c0_13 = arith.constant 0 : index
    %c0_14 = arith.constant 0 : index
    %16 = vector.load %arg6[%c0_13, %c0_14] : memref<128x128xbf16, #tpu.memory_space<vmem>>, vector<128x128xbf16>
    %cst_15 = arith.constant dense<0.000000e+00> : vector<8x128xf32>
    %17 = tpu.matmul %9, %16, %cst_15 {dimension_numbers = #tpu.dot_dimension_numbers<[1], [0], [0], [1], [0, 0, 1, 1], [], []>} : vector<8x128xbf16>, vector<128x128xbf16>, vector<8x128xf32> -> vector<8x128xf32>
    %c0_16 = arith.constant 0 : index
    %c0_17 = arith.constant 0 : index
    %18 = vector.load %arg7[%c0_16, %c0_17] : memref<1x128xf32, #tpu.memory_space<vmem>>, vector<1x128xf32>
    %19 = vector.broadcast %18 : vector<1x128xf32> to vector<8x128xf32>
    %20 = arith.addf %17, %19 : vector<8x128xf32>
    %cst_18 = arith.constant 0.000000e+00 : f32
    %21 = vector.broadcast %cst_18 : f32 to vector<8x128xf32>
    %22 = arith.maximumf %20, %21 : vector<8x128xf32>
    %23 = arith.truncf %22 : vector<8x128xf32> to vector<8x128xbf16>
    %c0_19 = arith.constant 0 : index
    %c0_20 = arith.constant 0 : index
    %24 = vector.load %arg8[%c0_19, %c0_20] : memref<128x128xbf16, #tpu.memory_space<vmem>>, vector<128x128xbf16>
    %cst_21 = arith.constant dense<0.000000e+00> : vector<8x128xf32>
    %25 = tpu.matmul %23, %24, %cst_21 {dimension_numbers = #tpu.dot_dimension_numbers<[1], [0], [0], [1], [0, 0, 1, 1], [], []>} : vector<8x128xbf16>, vector<128x128xbf16>, vector<8x128xf32> -> vector<8x128xf32>
    %c0_22 = arith.constant 0 : index
    %c0_23 = arith.constant 0 : index
    %26 = vector.load %arg9[%c0_22, %c0_23] : memref<1x128xf32, #tpu.memory_space<vmem>>, vector<1x128xf32>
    %27 = vector.broadcast %26 : vector<1x128xf32> to vector<8x128xf32>
    %28 = arith.addf %25, %27 : vector<8x128xf32>
    %cst_24 = arith.constant 0.000000e+00 : f32
    %29 = vector.broadcast %cst_24 : f32 to vector<8x128xf32>
    %30 = arith.subf %29, %28 : vector<8x128xf32>
    %31 = math.exp %30 : vector<8x128xf32>
    %cst_25 = arith.constant 1.000000e+00 : f32
    %32 = vector.broadcast %cst_25 : f32 to vector<8x128xf32>
    %33 = arith.addf %32, %31 : vector<8x128xf32>
    %34 = tpu.reciprocal %33 {approx = true} : vector<8x128xf32> -> vector<8x128xf32>
    %c0_26 = arith.constant 0 : index
    %c0_27 = arith.constant 0 : index
    %35 = vector.load %arg10[%c0_26, %c0_27] : memref<8x128xf32, #tpu.memory_space<vmem>>, vector<8x128xf32>
    tpu.vector_store %arg10[%c0_26, %c0_27], %34 {strides = array<i32>} : memref<8x128xf32, #tpu.memory_space<vmem>>, vector<8x128xf32>,
    return
  }
  func.func @transform_0(%arg0: i32) -> (i32, i32) {
    %c0_i32 = arith.constant 0 : i32
    %c0_i32_0 = arith.constant 0 : i32
    return %arg0, %c0_i32 : i32, i32
  }
  func.func @transform_1(%arg0: i32) -> (i32, i32) {
    %c0_i32 = arith.constant 0 : i32
    %c0_i32_0 = arith.constant 0 : i32
    %c0_i32_1 = arith.constant 0 : i32
    return %c0_i32, %c0_i32_0 : i32, i32
  }
  func.func @transform_2(%arg0: i32) -> (i32, i32) {
    %c0_i32 = arith.constant 0 : i32
    %c0_i32_0 = arith.constant 0 : i32
    %c0_i32_1 = arith.constant 0 : i32
    return %c0_i32, %c0_i32_0 : i32, i32
  }
  func.func @transform_3(%arg0: i32) -> (i32, i32) {
    %c0_i32 = arith.constant 0 : i32
    %c0_i32_0 = arith.constant 0 : i32
    %c0_i32_1 = arith.constant 0 : i32
    return %c0_i32, %c0_i32_0 : i32, i32
  }
  func.func @transform_4(%arg0: i32) -> (i32, i32) {
    %c0_i32 = arith.constant 0 : i32
    %c0_i32_0 = arith.constant 0 : i32
    %c0_i32_1 = arith.constant 0 : i32
    return %c0_i32, %c0_i32_0 : i32, i32
  }
  func.func @transform_5(%arg0: i32) -> (i32, i32) {
    %c0_i32 = arith.constant 0 : i32
    %c0_i32_0 = arith.constant 0 : i32
    %c0_i32_1 = arith.constant 0 : i32
    return %c0_i32, %c0_i32_0 : i32, i32
  }
  func.func @transform_6(%arg0: i32) -> (i32, i32) {
    %c0_i32 = arith.constant 0 : i32
    %c0_i32_0 = arith.constant 0 : i32
    %c0_i32_1 = arith.constant 0 : i32
    return %c0_i32, %c0_i32_0 : i32, i32
  }
  func.func @transform_7(%arg0: i32) -> (i32, i32) {
    %c0_i32 = arith.constant 0 : i32
    %c0_i32_0 = arith.constant 0 : i32
    %c0_i32_1 = arith.constant 0 : i32
    return %c0_i32, %c0_i32_0 : i32, i32
  }
  func.func @transform_8(%arg0: i32) -> (i32, i32) {
    %c0_i32 = arith.constant 0 : i32
    %c0_i32_0 = arith.constant 0 : i32
    %c0_i32_1 = arith.constant 0 : i32
    return %c0_i32, %c0_i32_0 : i32, i32
  }
  func.func @transform_9(%arg0: i32) -> (i32, i32) {
    %c0_i32 = arith.constant 0 : i32
    %c0_i32_0 = arith.constant 0 : i32
    return %arg0, %c0_i32 : i32, i32
  }
  func.func @transform_10(%arg0: i32) -> (i32, i32) {
    %c0_i32 = arith.constant 0 : i32
    %c0_i32_0 = arith.constant 0 : i32
    return %arg0, %c0_i32 : i32, i32
  }
}

</mosaic_0001>

<llo_original>
// kernel: tpu_custom_call.1
$region0: #{tpu_custom_call.1}
  #allocation0 [shape = 'u32[]', space=smem, size = 0x4, offset = 0x4, fixed_abs, tag = 'smem constant byte address 0x4 - core index']
  #allocation1 [shape = 'u32[72,128]{1,0:T(1,128)}', space=vmem, size = 0x9000, scoped, tag = 'internal scratch']
  %s0 = inlined_call_operand.hbm [shape: f32[8,32], index: 0, kind: input, shape index: {}]
  %s1 = inlined_call_operand.hbm [shape: bf16[32,128], index: 1, kind: input, shape index: {}]
  %s2 = inlined_call_operand.vmem [shape: f32[1,128], index: 2, kind: input, shape index: {}]
  %s3 = inlined_call_operand.hbm [shape: bf16[128,128], index: 3, kind: input, shape index: {}]
  %s4 = inlined_call_operand.vmem [shape: f32[1,128], index: 4, kind: input, shape index: {}]
  %s5 = inlined_call_operand.hbm [shape: bf16[128,128], index: 5, kind: input, shape index: {}]
  %s6 = inlined_call_operand.vmem [shape: f32[1,128], index: 6, kind: input, shape index: {}]
  %s7 = inlined_call_operand.hbm [shape: bf16[128,128], index: 7, kind: input, shape index: {}]
  %s8 = inlined_call_operand.vmem [shape: f32[1,128], index: 8, kind: input, shape index: {}]
  %s9 = inlined_call_operand.hbm [shape: f32[8,128], index: 9, kind: output, shape index: {0}]
  %s10 = inlined_call_operand.hbm [shape: f32[8,128], index: 10, kind: output, shape index: {1}]
  %11 = xla_tuple %s9, %s10
  %s12 = sld [smem:[#allocation0]]
  $region74: #{tpu_custom_call.1} parent=0
    _
  %s14 = ssub.s32 1, %s12
  %s15 = scalar_select 0, %s14, %s12
  $region1: #{tpu_custom_call.1} parent=0
    #allocation2 [shape = 'u8[4096]{0}', space=vmem, size = 0x1000, scoped, tag = 'input window, operand 0, single buffered']
    #allocation3 [shape = 's32[1]{0}', space=sflag, size = 0x4, scoped, tag = 'scoped memory for tpu_custom_call.1']
    #allocation4 [shape = 's32[1]{0}', space=sflag, size = 0x4, scoped, tag = 'scoped memory for tpu_custom_call.1']
    #allocation5 [shape = 'u8[8192]{0}', space=vmem, size = 0x2000, scoped, tag = 'input window, operand 1, single buffered']
    #allocation6 [shape = 's32[1]{0}', space=sflag, size = 0x4, scoped, tag = 'scoped memory for tpu_custom_call.1']
    #allocation7 [shape = 'u8[32768]{0}', space=vmem, size = 0x8000, scoped, tag = 'input window, operand 3, single buffered']
    #allocation8 [shape = 'u8[32768]{0}', space=vmem, size = 0x8000, scoped, tag = 'input window, operand 5, single buffered']
    #allocation9 [shape = 's32[1]{0}', space=sflag, size = 0x4, scoped, tag = 'scoped memory for tpu_custom_call.1']
    #allocation10 [shape = 'u8[32768]{0}', space=vmem, size = 0x8000, scoped, tag = 'input window, operand 7, single buffered']
    #allocation11 [shape = 'u8[4096]{0}', space=vmem, size = 0x1000, scoped, tag = 'output window, operand 0, single buffered']
    #allocation12 [shape = 'u8[4096]{0}', space=vmem, size = 0x1000, scoped, tag = 'output window, operand 1, single buffered']
    #allocation13 [shape = 's32[1]{0}', space=sflag, size = 0x4, scoped, tag = 'scoped memory for tpu_custom_call.1']
    %16 = vsyncpa [#allocation3], 0
    %17 = vsyncpa [#allocation6], 0
    %18 = vsyncpa [#allocation9], 0
    %19 = vsyncpa [#allocation4], 0
    %20 = vsyncpa [#allocation13], 0
    // Predicated region
    $region2: #{tpu_custom_call.1} parent=1 // pred_check
      _
    $region3: #{tpu_custom_call.1} parent=1 // pred_check_branch
      %22 = sbr.rel (0) target = $region5
    $region4: #{tpu_custom_call.1} parent=1 // pred_region
      %24 = vsyncadd [#allocation3], 0
      %s26 = sshll.u32 %s0, 4
      %s27 = int_to_ptr.hbm [resolvable:$true] %s26
      %s28 = sshll.u32 [#allocation2], 4
      %s29 = int_to_ptr.vmem [resolvable:$true] %s28
      %31 = dma.hbm_to_vmem [thread:$0]  %s27, 128, %s29, [#allocation3]
    $region5: #{tpu_custom_call.1} parent=1 // pred_fallthru
      _
    // Predicated region
    $region6: #{tpu_custom_call.1} parent=1 // pred_check
      _
    $region7: #{tpu_custom_call.1} parent=1 // pred_check_branch
      %33 = sbr.rel (0) target = $region9
    $region8: #{tpu_custom_call.1} parent=1 // pred_region
      %35 = vsyncadd [#allocation6], 0
      %s36 = sshll.u32 %s1, 4
      %s37 = int_to_ptr.hbm [resolvable:$true] %s36
      %s38 = sshll.u32 [#allocation5], 4
      %s39 = int_to_ptr.vmem [resolvable:$true] %s38
      %44 = dma.hbm_to_vmem [thread:$0]  %s37, 256, %s39, [#allocation6], 64, 64, 4
    $region9: #{tpu_custom_call.1} parent=1 // pred_fallthru
      _
    // Predicated region
    $region10: #{tpu_custom_call.1} parent=1 // pred_check
      _
    $region11: #{tpu_custom_call.1} parent=1 // pred_check_branch
      %46 = sbr.rel (0) target = $region13
    $region12: #{tpu_custom_call.1} parent=1 // pred_region
      _
    $region13: #{tpu_custom_call.1} parent=1 // pred_fallthru
      _
    // Predicated region
    $region14: #{tpu_custom_call.1} parent=1 // pred_check
      _
    $region15: #{tpu_custom_call.1} parent=1 // pred_check_branch
      %48 = sbr.rel (0) target = $region17
    $region16: #{tpu_custom_call.1} parent=1 // pred_region
      %50 = vsyncadd [#allocation6], 0
      %s51 = sshll.u32 %s3, 4
      %s52 = int_to_ptr.hbm [resolvable:$true] %s51
      %s53 = sshll.u32 [#allocation7], 4
      %s54 = int_to_ptr.vmem [resolvable:$true] %s53
      %59 = dma.hbm_to_vmem [thread:$0]  %s52, 1024, %s54, [#allocation6], 64, 64, 4
    $region17: #{tpu_custom_call.1} parent=1 // pred_fallthru
      _
    // Predicated region
    $region18: #{tpu_custom_call.1} parent=1 // pred_check
      _
    $region19: #{tpu_custom_call.1} parent=1 // pred_check_branch
      %61 = sbr.rel (0) target = $region21
    $region20: #{tpu_custom_call.1} parent=1 // pred_region
      _
    $region21: #{tpu_custom_call.1} parent=1 // pred_fallthru
      _
    // Predicated region
    $region22: #{tpu_custom_call.1} parent=1 // pred_check
      _
    $region23: #{tpu_custom_call.1} parent=1 // pred_check_branch
      %63 = sbr.rel (0) target = $region25
    $region24: #{tpu_custom_call.1} parent=1 // pred_region
      %65 = vsyncadd [#allocation9], 0
      %s66 = sshll.u32 %s5, 4
      %s67 = int_to_ptr.hbm [resolvable:$true] %s66
      %s68 = sshll.u32 [#allocation8], 4
      %s69 = int_to_ptr.vmem [resolvable:$true] %s68
      %74 = dma.hbm_to_vmem [thread:$0]  %s67, 1024, %s69, [#allocation9], 64, 64, 4
    $region25: #{tpu_custom_call.1} parent=1 // pred_fallthru
      _
    // Predicated region
    $region26: #{tpu_custom_call.1} parent=1 // pred_check
      _
    $region27: #{tpu_custom_call.1} parent=1 // pred_check_branch
      %76 = sbr.rel (0) target = $region29
    $region28: #{tpu_custom_call.1} parent=1 // pred_region
      _
    $region29: #{tpu_custom_call.1} parent=1 // pred_fallthru
      _
    // Predicated region
    $region30: #{tpu_custom_call.1} parent=1 // pred_check
      _
    $region31: #{tpu_custom_call.1} parent=1 // pred_check_branch
      %78 = sbr.rel (0) target = $region33
    $region32: #{tpu_custom_call.1} parent=1 // pred_region
      %80 = vsyncadd [#allocation9], 0
      %s81 = sshll.u32 %s7, 4
      %s82 = int_to_ptr.hbm [resolvable:$true] %s81
      %s83 = sshll.u32 [#allocation10], 4
      %s84 = int_to_ptr.vmem [resolvable:$true] %s83
      %89 = dma.hbm_to_vmem [thread:$0]  %s82, 1024, %s84, [#allocation9], 64, 64, 4
    $region33: #{tpu_custom_call.1} parent=1 // pred_fallthru
      _
    // Predicated region
    $region34: #{tpu_custom_call.1} parent=1 // pred_check
      _
    $region35: #{tpu_custom_call.1} parent=1 // pred_check_branch
      %91 = sbr.rel (0) target = $region37
    $region36: #{tpu_custom_call.1} parent=1 // pred_region
      _
    $region37: #{tpu_custom_call.1} parent=1 // pred_fallthru
      _
    // Predicated region
    $region38: #{tpu_custom_call.1} parent=1 // pred_check
      _
    $region39: #{tpu_custom_call.1} parent=1 // pred_check_branch
      %93 = sbr.rel (0) target = $region41
    $region40: #{tpu_custom_call.1} parent=1 // pred_region
      %95 = dma.done [#allocation3], 128
    $region41: #{tpu_custom_call.1} parent=1 // pred_fallthru
      _
    // Predicated region
    $region42: #{tpu_custom_call.1} parent=1 // pred_check
      _
    $region43: #{tpu_custom_call.1} parent=1 // pred_check_branch
      %97 = sbr.rel (0) target = $region45
    $region44: #{tpu_custom_call.1} parent=1 // pred_region
      %99 = dma.done [#allocation6], 256
    $region45: #{tpu_custom_call.1} parent=1 // pred_fallthru
      _
    // Predicated region
    $region46: #{tpu_custom_call.1} parent=1 // pred_check
      _
    $region47: #{tpu_custom_call.1} parent=1 // pred_check_branch
      %101 = sbr.rel (0) target = $region49
    $region48: #{tpu_custom_call.1} parent=1 // pred_region
      %103 = dma.done [#allocation6], 1024
    $region49: #{tpu_custom_call.1} parent=1 // pred_fallthru
      _
    // Predicated region
    $region50: #{tpu_custom_call.1} parent=1 // pred_check
      _
    $region51: #{tpu_custom_call.1} parent=1 // pred_check_branch
      %105 = sbr.rel (0) target = $region53
    $region52: #{tpu_custom_call.1} parent=1 // pred_region
      %107 = dma.done [#allocation9], 1024
    $region53: #{tpu_custom_call.1} parent=1 // pred_fallthru
      _
    // Predicated region
    $region54: #{tpu_custom_call.1} parent=1 // pred_check
      _
    $region55: #{tpu_custom_call.1} parent=1 // pred_check_branch
      %109 = sbr.rel (0) target = $region57
    $region56: #{tpu_custom_call.1} parent=1 // pred_region
      %111 = dma.done [#allocation9], 1024
    $region57: #{tpu_custom_call.1} parent=1 // pred_fallthru
      _
    %v113 = vld [vmem:[#allocation2] sm:$0xff]
    %v114 = vpack.c.bf16 %v113, %v113
    %v115 = vld [vmem:[#allocation5] sm:$0xf]
    %v116 = vld [vmem:[#allocation5 + $0x4] sm:$0xf]
    %v117 = vld [vmem:[#allocation5 + $0x8] sm:$0xf]
    %v118 = vld [vmem:[#allocation5 + $0xc] sm:$0xf]
    %v119 = vld [vmem:[%s2] sm:$0x1]
    %v121 = vperm.slane %v119, 0
    %v127 = vunpack.c.l.b16 %v115
    %v128 = vunpack.c.l.b16 %v116
    %v129 = vunpack.c.l.b16 %v117
    %v130 = vunpack.c.l.b16 %v118
    %v131 = vpack.c.b16 %v128, %v127
    %v132 = vpack.c.b16 %v130, %v129
    %vm135 = vcmask 261120
    %v137 = vsel %vm135, %v114, 0
    %139 = vmatpush.bf16.msra.mxu0 0
    %140 = vmatpush.bf16.msra.mxu0 0
    %141 = vmatpush.bf16.msra.mxu0 0
    %142 = vmatpush.bf16.msra.mxu0 0
    %143 = vmatpush.bf16.msra.mxu0 0
    %144 = vmatpush.bf16.msra.mxu0 0
    %145 = vmatpush.bf16.msra.mxu0 %v132
    %146 = vmatpush.bf16.msra.mxu0 %v131
    %147 = vmatmul.bf16.gmra.mxu0 %v137
    %v148 = vpop.f32.mrf.mxu0
    %v149 = vadd.f32 %v121, %v148
    %v150 = vpop.f32.mrf.mxu0
    %151 = vdwg.mxu0
    %v152 = vmax.f32 %v149, 0.0
    %v153 = vpack.c.bf16 %v152, %v152
    %v154 = vld [vmem:[#allocation7] sm:$0xf]
    %v155 = vld [vmem:[#allocation7 + $0x4] sm:$0xf]
    %v156 = vld [vmem:[#allocation7 + $0x8] sm:$0xf]
    %v157 = vld [vmem:[#allocation7 + $0xc] sm:$0xf]
    %v158 = vld [vmem:[#allocation7 + $0x10] sm:$0xf]
    %v159 = vld [vmem:[#allocation7 + $0x14] sm:$0xf]
    %v160 = vld [vmem:[#allocation7 + $0x18] sm:$0xf]
    %v161 = vld [vmem:[#allocation7 + $0x1c] sm:$0xf]
    %v162 = vld [vmem:[#allocation7 + $0x20] sm:$0xf]
    %v163 = vld [vmem:[#allocation7 + $0x24] sm:$0xf]
    %v164 = vld [vmem:[#allocation7 + $0x28] sm:$0xf]
    %v165 = vld [vmem:[#allocation7 + $0x2c] sm:$0xf]
    %v166 = vld [vmem:[#allocation7 + $0x30] sm:$0xf]
    %v167 = vld [vmem:[#allocation7 + $0x34] sm:$0xf]
    %v168 = vld [vmem:[#allocation7 + $0x38] sm:$0xf]
    %v169 = vld [vmem:[#allocation7 + $0x3c] sm:$0xf]
    %v170 = vld [vmem:[%s4] sm:$0x1]
    %v172 = vperm.slane %v170, 0
    %v190 = vunpack.c.l.b16 %v154
    %v191 = vunpack.c.l.b16 %v155
    %v192 = vunpack.c.l.b16 %v156
    %v193 = vunpack.c.l.b16 %v157
    %v194 = vunpack.c.l.b16 %v158
    %v195 = vunpack.c.l.b16 %v159
    %v196 = vunpack.c.l.b16 %v160
    %v197 = vunpack.c.l.b16 %v161
    %v198 = vunpack.c.l.b16 %v162
    %v199 = vunpack.c.l.b16 %v163
    %v200 = vunpack.c.l.b16 %v164
    %v201 = vunpack.c.l.b16 %v165
    %v202 = vunpack.c.l.b16 %v166
    %v203 = vunpack.c.l.b16 %v167
    %v204 = vunpack.c.l.b16 %v168
    %v205 = vunpack.c.l.b16 %v169
    %v206 = vpack.c.b16 %v191, %v190
    %v207 = vpack.c.b16 %v193, %v192
    %v208 = vpack.c.b16 %v195, %v194
    %v209 = vpack.c.b16 %v197, %v196
    %v210 = vpack.c.b16 %v199, %v198
    %v211 = vpack.c.b16 %v201, %v200
    %v212 = vpack.c.b16 %v203, %v202
    %v213 = vpack.c.b16 %v205, %v204
    %222 = vmatpush.bf16.msra.mxu0 %v213
    %223 = vmatpush.bf16.msra.mxu0 %v212
    %224 = vmatpush.bf16.msra.mxu0 %v211
    %225 = vmatpush.bf16.msra.mxu0 %v210
    %226 = vmatpush.bf16.msra.mxu0 %v209
    %227 = vmatpush.bf16.msra.mxu0 %v208
    %228 = vmatpush.bf16.msra.mxu0 %v207
    %229 = vmatpush.bf16.msra.mxu0 %v206
    %230 = vmatmul.bf16.gmra.mxu0 %v153
    %v231 = vpop.f32.mrf.mxu0
    %v232 = vadd.f32 %v172, %v231
    %v233 = vpop.f32.mrf.mxu0
    %234 = vdwg.mxu0
    %235 = vst [vmem:[#allocation12] sm:$0xff] %v232
    %v236 = vld [vmem:[#allocation8] sm:$0xf]
    %v237 = vld [vmem:[#allocation8 + $0x4] sm:$0xf]
    %v238 = vld [vmem:[#allocation8 + $0x8] sm:$0xf]
    %v239 = vld [vmem:[#allocation8 + $0xc] sm:$0xf]
    %v240 = vld [vmem:[#allocation8 + $0x10] sm:$0xf]
    %v241 = vld [vmem:[#allocation8 + $0x14] sm:$0xf]
    %v242 = vld [vmem:[#allocation8 + $0x18] sm:$0xf]
    %v243 = vld [vmem:[#allocation8 + $0x1c] sm:$0xf]
    %v244 = vld [vmem:[#allocation8 + $0x20] sm:$0xf]
    %v245 = vld [vmem:[#allocation8 + $0x24] sm:$0xf]
    %v246 = vld [vmem:[#allocation8 + $0x28] sm:$0xf]
    %v247 = vld [vmem:[#allocation8 + $0x2c] sm:$0xf]
    %v248 = vld [vmem:[#allocation8 + $0x30] sm:$0xf]
    %v249 = vld [vmem:[#allocation8 + $0x34] sm:$0xf]
    %v250 = vld [vmem:[#allocation8 + $0x38] sm:$0xf]
    %v251 = vld [vmem:[#allocation8 + $0x3c] sm:$0xf]
    %v252 = vld [vmem:[%s6] sm:$0x1]
    %v254 = vperm.slane %v252, 0
    %v272 = vunpack.c.l.b16 %v236
    %v273 = vunpack.c.l.b16 %v237
    %v274 = vunpack.c.l.b16 %v238
    %v275 = vunpack.c.l.b16 %v239
    %v276 = vunpack.c.l.b16 %v240
    %v277 = vunpack.c.l.b16 %v241
    %v278 = vunpack.c.l.b16 %v242
    %v279 = vunpack.c.l.b16 %v243
    %v280 = vunpack.c.l.b16 %v244
    %v281 = vunpack.c.l.b16 %v245
    %v282 = vunpack.c.l.b16 %v246
    %v283 = vunpack.c.l.b16 %v247
    %v284 = vunpack.c.l.b16 %v248
    %v285 = vunpack.c.l.b16 %v249
    %v286 = vunpack.c.l.b16 %v250
    %v287 = vunpack.c.l.b16 %v251
    %v288 = vpack.c.b16 %v273, %v272
    %v289 = vpack.c.b16 %v275, %v274
    %v290 = vpack.c.b16 %v277, %v276
    %v291 = vpack.c.b16 %v279, %v278
    %v292 = vpack.c.b16 %v281, %v280
    %v293 = vpack.c.b16 %v283, %v282
    %v294 = vpack.c.b16 %v285, %v284
    %v295 = vpack.c.b16 %v287, %v286
    %304 = vmatpush.bf16.msra.mxu0 %v295
    %305 = vmatpush.bf16.msra.mxu0 %v294
    %306 = vmatpush.bf16.msra.mxu0 %v293
    %307 = vmatpush.bf16.msra.mxu0 %v292
    %308 = vmatpush.bf16.msra.mxu0 %v291
    %309 = vmatpush.bf16.msra.mxu0 %v290
    %310 = vmatpush.bf16.msra.mxu0 %v289
    %311 = vmatpush.bf16.msra.mxu0 %v288
    %312 = vmatmul.bf16.gmra.mxu0 %v153
    %v313 = vpop.f32.mrf.mxu0
    %v314 = vadd.f32 %v254, %v313
    %v315 = vpop.f32.mrf.mxu0
    %316 = vdwg.mxu0
    %v317 = vmax.f32 %v314, 0.0
    %v318 = vpack.c.bf16 %v317, %v317
    %v319 = vld [vmem:[#allocation10] sm:$0xf]
    %v320 = vld [vmem:[#allocation10 + $0x4] sm:$0xf]
    %v321 = vld [vmem:[#allocation10 + $0x8] sm:$0xf]
    %v322 = vld [vmem:[#allocation10 + $0xc] sm:$0xf]
    %v323 = vld [vmem:[#allocation10 + $0x10] sm:$0xf]
    %v324 = vld [vmem:[#allocation10 + $0x14] sm:$0xf]
    %v325 = vld [vmem:[#allocation10 + $0x18] sm:$0xf]
    %v326 = vld [vmem:[#allocation10 + $0x1c] sm:$0xf]
    %v327 = vld [vmem:[#allocation10 + $0x20] sm:$0xf]
    %v328 = vld [vmem:[#allocation10 + $0x24] sm:$0xf]
    %v329 = vld [vmem:[#allocation10 + $0x28] sm:$0xf]
    %v330 = vld [vmem:[#allocation10 + $0x2c] sm:$0xf]
    %v331 = vld [vmem:[#allocation10 + $0x30] sm:$0xf]
    %v332 = vld [vmem:[#allocation10 + $0x34] sm:$0xf]
    %v333 = vld [vmem:[#allocation10 + $0x38] sm:$0xf]
    %v334 = vld [vmem:[#allocation10 + $0x3c] sm:$0xf]
    %v335 = vld [vmem:[%s8] sm:$0x1]
    %v337 = vperm.slane %v335, 0
    %v355 = vunpack.c.l.b16 %v319
    %v356 = vunpack.c.l.b16 %v320
    %v357 = vunpack.c.l.b16 %v321
    %v358 = vunpack.c.l.b16 %v322
    %v359 = vunpack.c.l.b16 %v323
    %v360 = vunpack.c.l.b16 %v324
    %v361 = vunpack.c.l.b16 %v325
    %v362 = vunpack.c.l.b16 %v326
    %v363 = vunpack.c.l.b16 %v327
    %v364 = vunpack.c.l.b16 %v328
    %v365 = vunpack.c.l.b16 %v329
    %v366 = vunpack.c.l.b16 %v330
    %v367 = vunpack.c.l.b16 %v331
    %v368 = vunpack.c.l.b16 %v332
    %v369 = vunpack.c.l.b16 %v333
    %v370 = vunpack.c.l.b16 %v334
    %v371 = vpack.c.b16 %v356, %v355
    %v372 = vpack.c.b16 %v358, %v357
    %v373 = vpack.c.b16 %v360, %v359
    %v374 = vpack.c.b16 %v362, %v361
    %v375 = vpack.c.b16 %v364, %v363
    %v376 = vpack.c.b16 %v366, %v365
    %v377 = vpack.c.b16 %v368, %v367
    %v378 = vpack.c.b16 %v370, %v369
    %387 = vmatpush.bf16.msra.mxu0 %v378
    %388 = vmatpush.bf16.msra.mxu0 %v377
    %389 = vmatpush.bf16.msra.mxu0 %v376
    %390 = vmatpush.bf16.msra.mxu0 %v375
    %391 = vmatpush.bf16.msra.mxu0 %v374
    %392 = vmatpush.bf16.msra.mxu0 %v373
    %393 = vmatpush.bf16.msra.mxu0 %v372
    %394 = vmatpush.bf16.msra.mxu0 %v371
    %395 = vmatmul.bf16.gmra.mxu0 %v318
    %v396 = vpop.f32.mrf.mxu0
    %v397 = vadd.f32 %v337, %v396
    %v398 = vpop.f32.mrf.mxu0
    %399 = vdwg.mxu0
    %v400 = vsub.f32 0.0, %v397
    %v401 = vmul.f32 %v400, 1.442695
    %v402 = vpow.pop %v401
    %v403 = vadd.f32 %v402, 1.0
    %v404 = vrcp.pop %v403
    %405 = vst [vmem:[#allocation11] sm:$0xff] %v404
    // Predicated region
    $region58: #{tpu_custom_call.1} parent=1 // pred_check
      _
    $region59: #{tpu_custom_call.1} parent=1 // pred_check_branch
      %407 = sbr.rel (0) target = $region61
    $region60: #{tpu_custom_call.1} parent=1 // pred_region
      %409 = vsyncadd [#allocation4], 0
      %s411 = sshll.u32 [#allocation11], 4
      %s412 = int_to_ptr.vmem [resolvable:$true] %s411
      %s413 = sshll.u32 %s9, 4
      %s414 = int_to_ptr.hbm [resolvable:$true] %s413
      %416 = dma.vmem_to_hbm [thread:$0]  %s412, 128, %s414, [#allocation4]
    $region61: #{tpu_custom_call.1} parent=1 // pred_fallthru
      _
    // Predicated region
    $region62: #{tpu_custom_call.1} parent=1 // pred_check
      _
    $region63: #{tpu_custom_call.1} parent=1 // pred_check_branch
      %418 = sbr.rel (0) target = $region65
    $region64: #{tpu_custom_call.1} parent=1 // pred_region
      %420 = vsyncadd [#allocation13], 0
      %s422 = sshll.u32 [#allocation12], 4
      %s423 = int_to_ptr.vmem [resolvable:$true] %s422
      %s424 = sshll.u32 %s10, 4
      %s425 = int_to_ptr.hbm [resolvable:$true] %s424
      %427 = dma.vmem_to_hbm [thread:$0]  %s423, 128, %s425, [#allocation13]
    $region65: #{tpu_custom_call.1} parent=1 // pred_fallthru
      _
    // Predicated region
    $region66: #{tpu_custom_call.1} parent=1 // pred_check
      _
    $region67: #{tpu_custom_call.1} parent=1 // pred_check_branch
      %429 = sbr.rel (0) target = $region69
    $region68: #{tpu_custom_call.1} parent=1 // pred_region
      %431 = dma.done [#allocation4], 128
    $region69: #{tpu_custom_call.1} parent=1 // pred_fallthru
      _
    // Predicated region
    $region70: #{tpu_custom_call.1} parent=1 // pred_check
      _
    $region71: #{tpu_custom_call.1} parent=1 // pred_check_branch
      %433 = sbr.rel (0) target = $region73
    $region72: #{tpu_custom_call.1} parent=1 // pred_region
      %435 = dma.done [#allocation13], 128
    $region73: #{tpu_custom_call.1} parent=1 // pred_fallthru
      _
    %436 = vsyncpa [#allocation3], 1
    %437 = vsyncpa [#allocation6], 1
    %438 = vsyncpa [#allocation9], 1
    %439 = vsyncpa [#allocation4], 1
    %440 = vsyncpa [#allocation13], 1

// kernel: tpu_custom_call.1
$region0: #{tpu_custom_call.1}
  #allocation0 [shape = 'u32[]', space=smem, size = 0x4, offset = 0x4, fixed_abs, tag = 'smem constant byte address 0x4 - core index']
  #allocation1 [shape = 'u32[72,128]{1,0:T(1,128)}', space=vmem, size = 0x9000, scoped, tag = 'internal scratch']
  %s0 = inlined_call_operand.hbm [shape: f32[8,32], index: 0, kind: input, shape index: {}]
  %s1 = inlined_call_operand.hbm [shape: bf16[32,128], index: 1, kind: input, shape index: {}]
  %s2 = inlined_call_operand.vmem [shape: f32[1,128], index: 2, kind: input, shape index: {}]
  %s3 = inlined_call_operand.hbm [shape: bf16[128,128], index: 3, kind: input, shape index: {}]
  %s4 = inlined_call_operand.vmem [shape: f32[1,128], index: 4, kind: input, shape index: {}]
  %s5 = inlined_call_operand.hbm [shape: bf16[128,128], index: 5, kind: input, shape index: {}]
  %s6 = inlined_call_operand.vmem [shape: f32[1,128], index: 6, kind: input, shape index: {}]
  %s7 = inlined_call_operand.hbm [shape: bf16[128,128], index: 7, kind: input, shape index: {}]
  %s8 = inlined_call_operand.vmem [shape: f32[1,128], index: 8, kind: input, shape index: {}]
  %s9 = inlined_call_operand.hbm [shape: f32[8,128], index: 9, kind: output, shape index: {0}]
  %s10 = inlined_call_operand.hbm [shape: f32[8,128], index: 10, kind: output, shape index: {1}]
  %11 = xla_tuple %s9, %s10
  %s12 = sld [smem:[#allocation0]]
  $region74: #{tpu_custom_call.1} parent=0
    _
  %s14 = ssub.s32 1, %s12
  %s15 = scalar_select 0, %s14, %s12
  $region1: #{tpu_custom_call.1} parent=0
    #allocation2 [shape = 'u8[4096]{0}', space=vmem, size = 0x1000, scoped, tag = 'input window, operand 0, single buffered']
    #allocation3 [shape = 's32[1]{0}', space=sflag, size = 0x4, scoped, tag = 'scoped memory for tpu_custom_call.1']
    #allocation4 [shape = 's32[1]{0}', space=sflag, size = 0x4, scoped, tag = 'scoped memory for tpu_custom_call.1']
    #allocation5 [shape = 'u8[8192]{0}', space=vmem, size = 0x2000, scoped, tag = 'input window, operand 1, single buffered']
    #allocation6 [shape = 's32[1]{0}', space=sflag, size = 0x4, scoped, tag = 'scoped memory for tpu_custom_call.1']
    #allocation7 [shape = 'u8[32768]{0}', space=vmem, size = 0x8000, scoped, tag = 'input window, operand 3, single buffered']
    #allocation8 [shape = 'u8[32768]{0}', space=vmem, size = 0x8000, scoped, tag = 'input window, operand 5, single buffered']
    #allocation9 [shape = 's32[1]{0}', space=sflag, size = 0x4, scoped, tag = 'scoped memory for tpu_custom_call.1']
    #allocation10 [shape = 'u8[32768]{0}', space=vmem, size = 0x8000, scoped, tag = 'input window, operand 7, single buffered']
    #allocation11 [shape = 'u8[4096]{0}', space=vmem, size = 0x1000, scoped, tag = 'output window, operand 0, single buffered']
    #allocation12 [shape = 'u8[4096]{0}', space=vmem, size = 0x1000, scoped, tag = 'output window, operand 1, single buffered']
    #allocation13 [shape = 's32[1]{0}', space=sflag, size = 0x4, scoped, tag = 'scoped memory for tpu_custom_call.1']
    %16 = vsyncpa [#allocation3], 0
    %17 = vsyncpa [#allocation6], 0
    %18 = vsyncpa [#allocation9], 0
    %19 = vsyncpa [#allocation4], 0
    %20 = vsyncpa [#allocation13], 0
    // Predicated region
    $region2: #{tpu_custom_call.1} parent=1 // pred_check
      _
    $region3: #{tpu_custom_call.1} parent=1 // pred_check_branch
      %22 = sbr.rel (0) target = $region5
    $region4: #{tpu_custom_call.1} parent=1 // pred_region
      %24 = vsyncadd [#allocation3], 0
      %s26 = sshll.u32 %s0, 4
      %s27 = int_to_ptr.hbm [resolvable:$true] %s26
      %s28 = sshll.u32 [#allocation2], 4
      %s29 = int_to_ptr.vmem [resolvable:$true] %s28
      %31 = dma.hbm_to_vmem [thread:$0]  %s27, 128, %s29, [#allocation3]
    $region5: #{tpu_custom_call.1} parent=1 // pred_fallthru
      _
    // Predicated region
    $region6: #{tpu_custom_call.1} parent=1 // pred_check
      _
    $region7: #{tpu_custom_call.1} parent=1 // pred_check_branch
      %33 = sbr.rel (0) target = $region9
    $region8: #{tpu_custom_call.1} parent=1 // pred_region
      %35 = vsyncadd [#allocation6], 0
      %s36 = sshll.u32 %s1, 4
      %s37 = int_to_ptr.hbm [resolvable:$true] %s36
      %s38 = sshll.u32 [#allocation5], 4
      %s39 = int_to_ptr.vmem [resolvable:$true] %s38
      %44 = dma.hbm_to_vmem [thread:$0]  %s37, 256, %s39, [#allocation6], 64, 64, 4
    $region9: #{tpu_custom_call.1} parent=1 // pred_fallthru
      _
    // Predicated region
    $region10: #{tpu_custom_call.1} parent=1 // pred_check
      _
    $region11: #{tpu_custom_call.1} parent=1 // pred_check_branch
      %46 = sbr.rel (0) target = $region13
    $region12: #{tpu_custom_call.1} parent=1 // pred_region
      _
    $region13: #{tpu_custom_call.1} parent=1 // pred_fallthru
      _
    // Predicated region
    $region14: #{tpu_custom_call.1} parent=1 // pred_check
      _
    $region15: #{tpu_custom_call.1} parent=1 // pred_check_branch
      %48 = sbr.rel (0) target = $region17
    $region16: #{tpu_custom_call.1} parent=1 // pred_region
      %50 = vsyncadd [#allocation6], 0
      %s51 = sshll.u32 %s3, 4
      %s52 = int_to_ptr.hbm [resolvable:$true] %s51
      %s53 = sshll.u32 [#allocation7], 4
      %s54 = int_to_ptr.vmem [resolvable:$true] %s53
      %59 = dma.hbm_to_vmem [thread:$0]  %s52, 1024, %s54, [#allocation6], 64, 64, 4
    $region17: #{tpu_custom_call.1} parent=1 // pred_fallthru
      _
    // Predicated region
    $region18: #{tpu_custom_call.1} parent=1 // pred_check
      _
    $region19: #{tpu_custom_call.1} parent=1 // pred_check_branch
      %61 = sbr.rel (0) target = $region21
    $region20: #{tpu_custom_call.1} parent=1 // pred_region
      _
    $region21: #{tpu_custom_call.1} parent=1 // pred_fallthru
      _
    // Predicated region
    $region22: #{tpu_custom_call.1} parent=1 // pred_check
      _
    $region23: #{tpu_custom_call.1} parent=1 // pred_check_branch
      %63 = sbr.rel (0) target = $region25
    $region24: #{tpu_custom_call.1} parent=1 // pred_region
      %65 = vsyncadd [#allocation9], 0
      %s66 = sshll.u32 %s5, 4
      %s67 = int_to_ptr.hbm [resolvable:$true] %s66
      %s68 = sshll.u32 [#allocation8], 4
      %s69 = int_to_ptr.vmem [resolvable:$true] %s68
      %74 = dma.hbm_to_vmem [thread:$0]  %s67, 1024, %s69, [#allocation9], 64, 64, 4
    $region25: #{tpu_custom_call.1} parent=1 // pred_fallthru
      _
    // Predicated region
    $region26: #{tpu_custom_call.1} parent=1 // pred_check
      _
    $region27: #{tpu_custom_call.1} parent=1 // pred_check_branch
      %76 = sbr.rel (0) target = $region29
    $region28: #{tpu_custom_call.1} parent=1 // pred_region
      _
    $region29: #{tpu_custom_call.1} parent=1 // pred_fallthru
      _
    // Predicated region
    $region30: #{tpu_custom_call.1} parent=1 // pred_check
      _
    $region31: #{tpu_custom_call.1} parent=1 // pred_check_branch
      %78 = sbr.rel (0) target = $region33
    $region32: #{tpu_custom_call.1} parent=1 // pred_region
      %80 = vsyncadd [#allocation9], 0
      %s81 = sshll.u32 %s7, 4
      %s82 = int_to_ptr.hbm [resolvable:$true] %s81
      %s83 = sshll.u32 [#allocation10], 4
      %s84 = int_to_ptr.vmem [resolvable:$true] %s83
      %89 = dma.hbm_to_vmem [thread:$0]  %s82, 1024, %s84, [#allocation9], 64, 64, 4
    $region33: #{tpu_custom_call.1} parent=1 // pred_fallthru
      _
    // Predicated region
    $region34: #{tpu_custom_call.1} parent=1 // pred_check
      _
    $region35: #{tpu_custom_call.1} parent=1 // pred_check_branch
      %91 = sbr.rel (0) target = $region37
    $region36: #{tpu_custom_call.1} parent=1 // pred_region
      _
    $region37: #{tpu_custom_call.1} parent=1 // pred_fallthru
      _
    // Predicated region
    $region38: #{tpu_custom_call.1} parent=1 // pred_check
      _
    $region39: #{tpu_custom_call.1} parent=1 // pred_check_branch
      %93 = sbr.rel (0) target = $region41
    $region40: #{tpu_custom_call.1} parent=1 // pred_region
      %95 = dma.done [#allocation3], 128
    $region41: #{tpu_custom_call.1} parent=1 // pred_fallthru
      _
    // Predicated region
    $region42: #{tpu_custom_call.1} parent=1 // pred_check
      _
    $region43: #{tpu_custom_call.1} parent=1 // pred_check_branch
      %97 = sbr.rel (0) target = $region45
    $region44: #{tpu_custom_call.1} parent=1 // pred_region
      %99 = dma.done [#allocation6], 256
    $region45: #{tpu_custom_call.1} parent=1 // pred_fallthru
      _
    // Predicated region
    $region46: #{tpu_custom_call.1} parent=1 // pred_check
      _
    $region47: #{tpu_custom_call.1} parent=1 // pred_check_branch
      %101 = sbr.rel (0) target = $region49
    $region48: #{tpu_custom_call.1} parent=1 // pred_region
      %103 = dma.done [#allocation6], 1024
    $region49: #{tpu_custom_call.1} parent=1 // pred_fallthru
      _
    // Predicated region
    $region50: #{tpu_custom_call.1} parent=1 // pred_check
      _
    $region51: #{tpu_custom_call.1} parent=1 // pred_check_branch
      %105 = sbr.rel (0) target = $region53
    $region52: #{tpu_custom_call.1} parent=1 // pred_region
      %107 = dma.done [#allocation9], 1024
    $region53: #{tpu_custom_call.1} parent=1 // pred_fallthru
      _
    // Predicated region
    $region54: #{tpu_custom_call.1} parent=1 // pred_check
      _
    $region55: #{tpu_custom_call.1} parent=1 // pred_check_branch
      %109 = sbr.rel (0) target = $region57
    $region56: #{tpu_custom_call.1} parent=1 // pred_region
      %111 = dma.done [#allocation9], 1024
    $region57: #{tpu_custom_call.1} parent=1 // pred_fallthru
      _
    %v113 = vld [vmem:[#allocation2] sm:$0xff]
    %v114 = vpack.c.bf16 %v113, %v113
    %v115 = vld [vmem:[#allocation5] sm:$0xf]
    %v116 = vld [vmem:[#allocation5 + $0x4] sm:$0xf]
    %v117 = vld [vmem:[#allocation5 + $0x8] sm:$0xf]
    %v118 = vld [vmem:[#allocation5 + $0xc] sm:$0xf]
    %v119 = vld [vmem:[%s2] sm:$0x1]
    %v121 = vperm.slane %v119, 0
    %v127 = vunpack.c.l.b16 %v115
    %v128 = vunpack.c.l.b16 %v116
    %v129 = vunpack.c.l.b16 %v117
    %v130 = vunpack.c.l.b16 %v118
    %v131 = vpack.c.b16 %v128, %v127
    %v132 = vpack.c.b16 %v130, %v129
    %vm135 = vcmask 261120
    %v137 = vsel %vm135, %v114, 0
    %139 = vmatpush.bf16.msra.mxu0 0
    %140 = vmatpush.bf16.msra.mxu0 0
    %141 = vmatpush.bf16.msra.mxu0 0
    %142 = vmatpush.bf16.msra.mxu0 0
    %143 = vmatpush.bf16.msra.mxu0 0
    %144 = vmatpush.bf16.msra.mxu0 0
    %145 = vmatpush.bf16.msra.mxu0 %v132
    %146 = vmatpush.bf16.msra.mxu0 %v131
    %147 = vmatmul.bf16.gmra.mxu0 %v137
    %v148 = vpop.f32.mrf.mxu0
    %v149 = vadd.f32 %v121, %v148
    %v150 = vpop.f32.mrf.mxu0
    %151 = vdwg.mxu0
    %v152 = vmax.f32 %v149, 0.0
    %v153 = vpack.c.bf16 %v152, %v152
    %v154 = vld [vmem:[#allocation7] sm:$0xf]
    %v155 = vld [vmem:[#allocation7 + $0x4] sm:$0xf]
    %v156 = vld [vmem:[#allocation7 + $0x8] sm:$0xf]
    %v157 = vld [vmem:[#allocation7 + $0xc] sm:$0xf]
    %v158 = vld [vmem:[#allocation7 + $0x10] sm:$0xf]
    %v159 = vld [vmem:[#allocation7 + $0x14] sm:$0xf]
    %v160 = vld [vmem:[#allocation7 + $0x18] sm:$0xf]
    %v161 = vld [vmem:[#allocation7 + $0x1c] sm:$0xf]
    %v162 = vld [vmem:[#allocation7 + $0x20] sm:$0xf]
    %v163 = vld [vmem:[#allocation7 + $0x24] sm:$0xf]
    %v164 = vld [vmem:[#allocation7 + $0x28] sm:$0xf]
    %v165 = vld [vmem:[#allocation7 + $0x2c] sm:$0xf]
    %v166 = vld [vmem:[#allocation7 + $0x30] sm:$0xf]
    %v167 = vld [vmem:[#allocation7 + $0x34] sm:$0xf]
    %v168 = vld [vmem:[#allocation7 + $0x38] sm:$0xf]
    %v169 = vld [vmem:[#allocation7 + $0x3c] sm:$0xf]
    %v170 = vld [vmem:[%s4] sm:$0x1]
    %v172 = vperm.slane %v170, 0
    %v190 = vunpack.c.l.b16 %v154
    %v191 = vunpack.c.l.b16 %v155
    %v192 = vunpack.c.l.b16 %v156
    %v193 = vunpack.c.l.b16 %v157
    %v194 = vunpack.c.l.b16 %v158
    %v195 = vunpack.c.l.b16 %v159
    %v196 = vunpack.c.l.b16 %v160
    %v197 = vunpack.c.l.b16 %v161
    %v198 = vunpack.c.l.b16 %v162
    %v199 = vunpack.c.l.b16 %v163
    %v200 = vunpack.c.l.b16 %v164
    %v201 = vunpack.c.l.b16 %v165
    %v202 = vunpack.c.l.b16 %v166
    %v203 = vunpack.c.l.b16 %v167
    %v204 = vunpack.c.l.b16 %v168
    %v205 = vunpack.c.l.b16 %v169
    %v206 = vpack.c.b16 %v191, %v190
    %v207 = vpack.c.b16 %v193, %v192
    %v208 = vpack.c.b16 %v195, %v194
    %v209 = vpack.c.b16 %v197, %v196
    %v210 = vpack.c.b16 %v199, %v198
    %v211 = vpack.c.b16 %v201, %v200
    %v212 = vpack.c.b16 %v203, %v202
    %v213 = vpack.c.b16 %v205, %v204
    %222 = vmatpush.bf16.msra.mxu0 %v213
    %223 = vmatpush.bf16.msra.mxu0 %v212
    %224 = vmatpush.bf16.msra.mxu0 %v211
    %225 = vmatpush.bf16.msra.mxu0 %v210
    %226 = vmatpush.bf16.msra.mxu0 %v209
    %227 = vmatpush.bf16.msra.mxu0 %v208
    %228 = vmatpush.bf16.msra.mxu0 %v207
    %229 = vmatpush.bf16.msra.mxu0 %v206
    %230 = vmatmul.bf16.gmra.mxu0 %v153
    %v231 = vpop.f32.mrf.mxu0
    %v232 = vadd.f32 %v172, %v231
    %v233 = vpop.f32.mrf.mxu0
    %234 = vdwg.mxu0
    %235 = vst [vmem:[#allocation12] sm:$0xff] %v232
    %v236 = vld [vmem:[#allocation8] sm:$0xf]
    %v237 = vld [vmem:[#allocation8 + $0x4] sm:$0xf]
    %v238 = vld [vmem:[#allocation8 + $0x8] sm:$0xf]
    %v239 = vld [vmem:[#allocation8 + $0xc] sm:$0xf]
    %v240 = vld [vmem:[#allocation8 + $0x10] sm:$0xf]
    %v241 = vld [vmem:[#allocation8 + $0x14] sm:$0xf]
    %v242 = vld [vmem:[#allocation8 + $0x18] sm:$0xf]
    %v243 = vld [vmem:[#allocation8 + $0x1c] sm:$0xf]
    %v244 = vld [vmem:[#allocation8 + $0x20] sm:$0xf]
    %v245 = vld [vmem:[#allocation8 + $0x24] sm:$0xf]
    %v246 = vld [vmem:[#allocation8 + $0x28] sm:$0xf]
    %v247 = vld [vmem:[#allocation8 + $0x2c] sm:$0xf]
    %v248 = vld [vmem:[#allocation8 + $0x30] sm:$0xf]
    %v249 = vld [vmem:[#allocation8 + $0x34] sm:$0xf]
    %v250 = vld [vmem:[#allocation8 + $0x38] sm:$0xf]
    %v251 = vld [vmem:[#allocation8 + $0x3c] sm:$0xf]
    %v252 = vld [vmem:[%s6] sm:$0x1]
    %v254 = vperm.slane %v252, 0
    %v272 = vunpack.c.l.b16 %v236
    %v273 = vunpack.c.l.b16 %v237
    %v274 = vunpack.c.l.b16 %v238
    %v275 = vunpack.c.l.b16 %v239
    %v276 = vunpack.c.l.b16 %v240
    %v277 = vunpack.c.l.b16 %v241
    %v278 = vunpack.c.l.b16 %v242
    %v279 = vunpack.c.l.b16 %v243
    %v280 = vunpack.c.l.b16 %v244
    %v281 = vunpack.c.l.b16 %v245
    %v282 = vunpack.c.l.b16 %v246
    %v283 = vunpack.c.l.b16 %v247
    %v284 = vunpack.c.l.b16 %v248
    %v285 = vunpack.c.l.b16 %v249
    %v286 = vunpack.c.l.b16 %v250
    %v287 = vunpack.c.l.b16 %v251
    %v288 = vpack.c.b16 %v273, %v272
    %v289 = vpack.c.b16 %v275, %v274
    %v290 = vpack.c.b16 %v277, %v276
    %v291 = vpack.c.b16 %v279, %v278
    %v292 = vpack.c.b16 %v281, %v280
    %v293 = vpack.c.b16 %v283, %v282
    %v294 = vpack.c.b16 %v285, %v284
    %v295 = vpack.c.b16 %v287, %v286
    %304 = vmatpush.bf16.msra.mxu0 %v295
    %305 = vmatpush.bf16.msra.mxu0 %v294
    %306 = vmatpush.bf16.msra.mxu0 %v293
    %307 = vmatpush.bf16.msra.mxu0 %v292
    %308 = vmatpush.bf16.msra.mxu0 %v291
    %309 = vmatpush.bf16.msra.mxu0 %v290
    %310 = vmatpush.bf16.msra.mxu0 %v289
    %311 = vmatpush.bf16.msra.mxu0 %v288
    %312 = vmatmul.bf16.gmra.mxu0 %v153
    %v313 = vpop.f32.mrf.mxu0
    %v314 = vadd.f32 %v254, %v313
    %v315 = vpop.f32.mrf.mxu0
    %316 = vdwg.mxu0
    %v317 = vmax.f32 %v314, 0.0
    %v318 = vpack.c.bf16 %v317, %v317
    %v319 = vld [vmem:[#allocation10] sm:$0xf]
    %v320 = vld [vmem:[#allocation10 + $0x4] sm:$0xf]
    %v321 = vld [vmem:[#allocation10 + $0x8] sm:$0xf]
    %v322 = vld [vmem:[#allocation10 + $0xc] sm:$0xf]
    %v323 = vld [vmem:[#allocation10 + $0x10] sm:$0xf]
    %v324 = vld [vmem:[#allocation10 + $0x14] sm:$0xf]
    %v325 = vld [vmem:[#allocation10 + $0x18] sm:$0xf]
    %v326 = vld [vmem:[#allocation10 + $0x1c] sm:$0xf]
    %v327 = vld [vmem:[#allocation10 + $0x20] sm:$0xf]
    %v328 = vld [vmem:[#allocation10 + $0x24] sm:$0xf]
    %v329 = vld [vmem:[#allocation10 + $0x28] sm:$0xf]
    %v330 = vld [vmem:[#allocation10 + $0x2c] sm:$0xf]
    %v331 = vld [vmem:[#allocation10 + $0x30] sm:$0xf]
    %v332 = vld [vmem:[#allocation10 + $0x34] sm:$0xf]
    %v333 = vld [vmem:[#allocation10 + $0x38] sm:$0xf]
    %v334 = vld [vmem:[#allocation10 + $0x3c] sm:$0xf]
    %v335 = vld [vmem:[%s8] sm:$0x1]
    %v337 = vperm.slane %v335, 0
    %v355 = vunpack.c.l.b16 %v319
    %v356 = vunpack.c.l.b16 %v320
    %v357 = vunpack.c.l.b16 %v321
    %v358 = vunpack.c.l.b16 %v322
    %v359 = vunpack.c.l.b16 %v323
    %v360 = vunpack.c.l.b16 %v324
    %v361 = vunpack.c.l.b16 %v325
    %v362 = vunpack.c.l.b16 %v326
    %v363 = vunpack.c.l.b16 %v327
    %v364 = vunpack.c.l.b16 %v328
    %v365 = vunpack.c.l.b16 %v329
    %v366 = vunpack.c.l.b16 %v330
    %v367 = vunpack.c.l.b16 %v331
    %v368 = vunpack.c.l.b16 %v332
    %v369 = vunpack.c.l.b16 %v333
    %v370 = vunpack.c.l.b16 %v334
    %v371 = vpack.c.b16 %v356, %v355
    %v372 = vpack.c.b16 %v358, %v357
    %v373 = vpack.c.b16 %v360, %v359
    %v374 = vpack.c.b16 %v362, %v361
    %v375 = vpack.c.b16 %v364, %v363
    %v376 = vpack.c.b16 %v366, %v365
    %v377 = vpack.c.b16 %v368, %v367
    %v378 = vpack.c.b16 %v370, %v369
    %387 = vmatpush.bf16.msra.mxu0 %v378
    %388 = vmatpush.bf16.msra.mxu0 %v377
    %389 = vmatpush.bf16.msra.mxu0 %v376
    %390 = vmatpush.bf16.msra.mxu0 %v375
    %391 = vmatpush.bf16.msra.mxu0 %v374
    %392 = vmatpush.bf16.msra.mxu0 %v373
    %393 = vmatpush.bf16.msra.mxu0 %v372
    %394 = vmatpush.bf16.msra.mxu0 %v371
    %395 = vmatmul.bf16.gmra.mxu0 %v318
    %v396 = vpop.f32.mrf.mxu0
    %v397 = vadd.f32 %v337, %v396
    %v398 = vpop.f32.mrf.mxu0
    %399 = vdwg.mxu0
    %v400 = vsub.f32 0.0, %v397
    %v401 = vmul.f32 %v400, 1.442695
    %v402 = vpow.pop %v401
    %v403 = vadd.f32 %v402, 1.0
    %v404 = vrcp.pop %v403
    %405 = vst [vmem:[#allocation11] sm:$0xff] %v404
    // Predicated region
    $region58: #{tpu_custom_call.1} parent=1 // pred_check
      _
    $region59: #{tpu_custom_call.1} parent=1 // pred_check_branch
      %407 = sbr.rel (0) target = $region61
    $region60: #{tpu_custom_call.1} parent=1 // pred_region
      %409 = vsyncadd [#allocation4], 0
      %s411 = sshll.u32 [#allocation11], 4
      %s412 = int_to_ptr.vmem [resolvable:$true] %s411
      %s413 = sshll.u32 %s9, 4
      %s414 = int_to_ptr.hbm [resolvable:$true] %s413
      %416 = dma.vmem_to_hbm [thread:$0]  %s412, 128, %s414, [#allocation4]
    $region61: #{tpu_custom_call.1} parent=1 // pred_fallthru
      _
    // Predicated region
    $region62: #{tpu_custom_call.1} parent=1 // pred_check
      _
    $region63: #{tpu_custom_call.1} parent=1 // pred_check_branch
      %418 = sbr.rel (0) target = $region65
    $region64: #{tpu_custom_call.1} parent=1 // pred_region
      %420 = vsyncadd [#allocation13], 0
      %s422 = sshll.u32 [#allocation12], 4
      %s423 = int_to_ptr.vmem [resolvable:$true] %s422
      %s424 = sshll.u32 %s10, 4
      %s425 = int_to_ptr.hbm [resolvable:$true] %s424
      %427 = dma.vmem_to_hbm [thread:$0]  %s423, 128, %s425, [#allocation13]
    $region65: #{tpu_custom_call.1} parent=1 // pred_fallthru
      _
    // Predicated region
    $region66: #{tpu_custom_call.1} parent=1 // pred_check
      _
    $region67: #{tpu_custom_call.1} parent=1 // pred_check_branch
      %429 = sbr.rel (0) target = $region69
    $region68: #{tpu_custom_call.1} parent=1 // pred_region
      %431 = dma.done [#allocation4], 128
    $region69: #{tpu_custom_call.1} parent=1 // pred_fallthru
      _
    // Predicated region
    $region70: #{tpu_custom_call.1} parent=1 // pred_check
      _
    $region71: #{tpu_custom_call.1} parent=1 // pred_check_branch
      %433 = sbr.rel (0) target = $region73
    $region72: #{tpu_custom_call.1} parent=1 // pred_region
      %435 = dma.done [#allocation13], 128
    $region73: #{tpu_custom_call.1} parent=1 // pred_fallthru
      _
    %436 = vsyncpa [#allocation3], 1
    %437 = vsyncpa [#allocation6], 1
    %438 = vsyncpa [#allocation9], 1
    %439 = vsyncpa [#allocation4], 1
    %440 = vsyncpa [#allocation13], 1

</llo_original>
